<compile_context>
chip_gen: v5e
topology: v5e:2x2
jax: 0.10.0
libtpu: 0.0.40
codegen_flags: <defaults>
</compile_context>

<pallas_src>
import math

import jax
import jax.numpy as jnp
from jax.experimental import pallas as pl
from jax.experimental.pallas import tpu as pltpu


def _vmem_budgets():
    """Chip-aware byte budgets: (per-block bytes, vmem_limit_bytes)."""
    try:
        vmem_bytes = int(pltpu.get_tpu_info().vmem_capacity_bytes)
    except Exception:
        vmem_bytes = 64 << 20          # conservative default: v7x per-core VMEM
    # 4 live blocks (input + output, each double-buffered); keep them ~1/3 of
    # VMEM. v5e/v6e (128 MiB) -> 8 MiB blocks; v7x (64 MiB) -> ~5.3 MiB blocks.
    block_budget = max(1 << 20, min(8 << 20, vmem_bytes // 12))
    vmem_limit = int(min(vmem_bytes * 3 // 4, 96 << 20))
    return block_budget, vmem_limit


def _drop_path_rows_kernel(scale_ref, x_ref, o_ref):
    """scale_ref: (B,) f32 in SMEM; x_ref/o_ref: (1, R, 128) VMEM blocks."""
    b = pl.program_id(0)
    s = scale_ref[b].astype(o_ref.dtype)       # per-sample 0 or 1/keep_prob
    o_ref[...] = x_ref[...] * s


def _drop_path_cols_kernel(scale_ref, x_ref, o_ref):
    """scale_ref: (B, 1) f32 VMEM block; x_ref/o_ref: (B, block_m) blocks."""
    o_ref[...] = x_ref[...] * scale_ref[...].astype(o_ref.dtype)


def drop_path(x, *, drop_prob=0.0, training=False, key=None):
    """Per-sample stochastic depth; mirrors torch drop_path(x, drop_prob, training)."""
    if drop_prob == 0.0 or not training:
        return x                                # identity, same as the PyTorch module
    if key is None:
        raise ValueError("drop_path: a PRNG key is required when training with drop_prob > 0")

    keep_prob = 1.0 - float(drop_prob)
    B = x.shape[0]
    M = math.prod(x.shape[1:]) if x.ndim > 1 else 1
    itemsize = x.dtype.itemsize
    block_budget, vmem_limit = _vmem_budgets()

    # Same per-sample uniform draw the PyTorch code takes (torch.rand); fold
    # floor() mask and 1/keep_prob into one per-sample scale up front so the
    # kernel body is exactly one broadcast multiply under the DMA.
    rand = jax.random.uniform(key, (B,), dtype=jnp.float32)
    scale = jnp.floor(keep_prob + rand) * (1.0 / keep_prob)     # (B,) f32

    if M >= 128 and M % 128 == 0:
        # Aligned path: full-sublane (1, R, 128) tiles, scale read from SMEM.
        M128 = M // 128
        x3 = x.reshape(B, M128, 128)
        rows = (block_budget // (128 * itemsize)) // 8 * 8      # dtype-aware rows/block
        R = M128 if rows >= M128 else max(8, rows)
        if B == 1 and R == M128 and M128 >= 16:
            # Always expose >= 2 grid steps so both TensorCores stream (v7x).
            R = max(8, ((pl.cdiv(M128, 2) + 7) // 8) * 8)
        grid_r = pl.cdiv(M128, R)

        out = pl.pallas_call(
            _drop_path_rows_kernel,
            out_shape=jax.ShapeDtypeStruct((B, M128, 128), x.dtype),
            grid_spec=pltpu.PrefetchScalarGridSpec(
                num_scalar_prefetch=0,
                grid=(B, grid_r),
                in_specs=[
                    pl.BlockSpec(memory_space=pltpu.MemorySpace.SMEM),    # (B,) scale
                    pl.BlockSpec((1, R, 128), lambda b, r: (b, r, 0)),    # x tile
                ],
                out_specs=pl.BlockSpec((1, R, 128), lambda b, r: (b, r, 0)),
            ),
            compiler_params=pltpu.CompilerParams(
                dimension_semantics=("parallel", "parallel"),
                vmem_limit_bytes=vmem_limit),
        )(scale, x3)
        return out.reshape(x.shape)

    # Fallback: feature count not a multiple of 128. Tile the flattened
    # feature axis with lane-dense 128-multiple blocks (the partial trailing
    # block is masked by Pallas) so the DMA stays pipelined.
    # TODO(synk): for extremely large B the (B, block_m) tile can exceed the
    # VMEM budget; pad M up to a multiple of 128 and reuse the aligned path.
    x2 = x.reshape(B, M)
    scale2 = scale.reshape(B, 1)
    if M <= 128:
        block_m = M
    else:
        block_m = max(128, (block_budget // (B * itemsize)) // 128 * 128)
        block_m = min(block_m, pl.cdiv(M, 128) * 128)
        if block_m >= M:
            # Expose >= 2 grid steps so both TensorCores stream (v7x).
            block_m = max(128, ((pl.cdiv(M, 2) + 127) // 128) * 128)
    grid_m = pl.cdiv(M, block_m)

    out = pl.pallas_call(
        _drop_path_cols_kernel,
        out_shape=jax.ShapeDtypeStruct((B, M), x.dtype),
        grid_spec=pltpu.PrefetchScalarGridSpec(
            num_scalar_prefetch=0,
            grid=(grid_m,),
            in_specs=[
                pl.BlockSpec((B, 1), lambda m: (0, 0)),        # per-sample scale
                pl.BlockSpec((B, block_m), lambda m: (0, m)),  # x slab (all samples)
            ],
            out_specs=pl.BlockSpec((B, block_m), lambda m: (0, m)),
        ),
        compiler_params=pltpu.CompilerParams(
            dimension_semantics=("parallel",),
            vmem_limit_bytes=vmem_limit),
    )(scale2, x2)
    return out.reshape(x.shape)


def drop_path_ref(x, *, drop_prob=0.0, training=False, key=None):
    """Pure-JAX reference mirroring the PyTorch drop_path() exactly."""
    if drop_prob == 0.0 or not training:
        return x
    keep_prob = 1.0 - float(drop_prob)
    rand = jax.random.uniform(key, (x.shape[0],), dtype=jnp.float32)
    shape = (x.shape[0],) + (1,) * (x.ndim - 1)
    mask = jnp.floor(keep_prob + rand).reshape(shape).astype(x.dtype)
    return x / keep_prob * mask


if __name__ == "__main__":
    # Small shapes consistent with the module's use on per-sample features.
    B, C, H, W = 2, 4, 16, 16         # aligned path: M = 1024 (multiple of 128)
    drop_prob = 0.5

    key = jax.random.PRNGKey(0)
    kx, kd, kx2 = jax.random.split(key, 3)
    x = jax.random.normal(kx, (B, C, H, W), jnp.float32)

    # Training path (aligned, full-sublane tiles + SMEM per-sample scale).
    out = drop_path(x, drop_prob=drop_prob, training=True, key=kd)
    out = jax.block_until_ready(out)
    ref = drop_path_ref(x, drop_prob=drop_prob, training=True, key=kd)
    assert out.shape == x.shape
    assert jnp.allclose(out, ref, atol=1e-6, rtol=1e-6), "aligned path mismatch vs reference"

    # Unaligned fallback path (M = 8*30 = 240, not a multiple of 128).
    x_u = jax.random.normal(kx2, (2, 8, 30), jnp.float32)
    out_u = jax.block_until_ready(drop_path(x_u, drop_prob=drop_prob, training=True, key=kd))
    ref_u = drop_path_ref(x_u, drop_prob=drop_prob, training=True, key=kd)
    assert jnp.allclose(out_u, ref_u, atol=1e-6, rtol=1e-6), "fallback path mismatch vs reference"

    # Eval mode / drop_prob == 0 is identity, exactly like the PyTorch module.
    out_eval = drop_path(x, drop_prob=drop_prob, training=False, key=kd)
    assert jnp.array_equal(out_eval, x)
    out_p0 = drop_path(x, drop_prob=0.0, training=True, key=kd)
    assert jnp.array_equal(out_p0, x)

    print("KERNEL_OK")
</pallas_src>

<mosaic_0001>
module attributes {stable_mosaic.version = 11 : i64} {
  func.func @_drop_path_rows_kernel(%arg0: i32, %arg1: i32, %arg2: memref<2xf32, #tpu.memory_space<smem>>, %arg3: memref<1x8x128xf32, #tpu.memory_space<vmem>>, %arg4: memref<1x8x128xf32, #tpu.memory_space<vmem>>) attributes {dimension_semantics = [#tpu.dimension_semantics<parallel>, #tpu.dimension_semantics<parallel>], iteration_bounds = array<i64: 2, 1>, scalar_prefetch = 0 : i64, scratch_operands = 0 : i64, tpu.core_type = #tpu.core_type<tc>, window_params = [{transform_indices = @transform_0, window_bounds = array<i64: 2>}, {transform_indices = @transform_1, window_bounds = array<i64: 1, 8, 128>}, {transform_indices = @transform_2, window_bounds = array<i64: 1, 8, 128>}]} {
    %0 = arith.index_cast %arg0 : i32 to index
    %1 = memref.load %arg2[%0] : memref<2xf32, #tpu.memory_space<smem>>
    %c0 = arith.constant 0 : index
    %c0_0 = arith.constant 0 : index
    %c0_1 = arith.constant 0 : index
    %2 = vector.load %arg3[%c0, %c0_0, %c0_1] : memref<1x8x128xf32, #tpu.memory_space<vmem>>, vector<1x8x128xf32>
    %3 = vector.broadcast %1 : f32 to vector<1x8x128xf32>
    %4 = arith.mulf %2, %3 : vector<1x8x128xf32>
    %c0_2 = arith.constant 0 : index
    %c0_3 = arith.constant 0 : index
    %c0_4 = arith.constant 0 : index
    %5 = vector.load %arg4[%c0_2, %c0_3, %c0_4] : memref<1x8x128xf32, #tpu.memory_space<vmem>>, vector<1x8x128xf32>
    tpu.vector_store %arg4[%c0_2, %c0_3, %c0_4], %4 {strides = array<i32>} : memref<1x8x128xf32, #tpu.memory_space<vmem>>, vector<1x8x128xf32>,
    return
  }
  func.func @transform_0(%arg0: i32, %arg1: i32) -> i32 {
    %c0_i32 = arith.constant 0 : i32
    %c0_i32_0 = arith.constant 0 : i32
    return %c0_i32 : i32
  }
  func.func @transform_1(%arg0: i32, %arg1: i32) -> (i32, i32, i32) {
    %c0_i32 = arith.constant 0 : i32
    %c0_i32_0 = arith.constant 0 : i32
    return %arg0, %arg1, %c0_i32 : i32, i32, i32
  }
  func.func @transform_2(%arg0: i32, %arg1: i32) -> (i32, i32, i32) {
    %c0_i32 = arith.constant 0 : i32
    %c0_i32_0 = arith.constant 0 : i32
    return %arg0, %arg1, %c0_i32 : i32, i32, i32
  }
}

</mosaic_0001>

<llo_original>
// kernel: tpu_custom_call.1
$region0: #{tpu_custom_call.1}
  #allocation0 [shape = 'u32[]', space=smem, size = 0x4, offset = 0x4, fixed_abs, tag = 'smem constant byte address 0x4 - core index']
  #allocation1 [shape = 'u32[72,128]{1,0:T(1,128)}', space=vmem, size = 0x9000, scoped, tag = 'internal scratch']
  %s0 = inlined_call_operand.hbm [shape: f32[2], index: 0, kind: input, shape index: {}]
  %s1 = inlined_call_operand.hbm [shape: f32[2,8,128], index: 1, kind: input, shape index: {}]
  %s2 = inlined_call_operand.hbm [shape: f32[2,8,128], index: 2, kind: output, shape index: {}]
  %s3 = sld [smem:[#allocation0]]
  $region49: #{tpu_custom_call.1} parent=0
    _
  %s5 = ssub.s32 1, %s3
  %s6 = scalar_select 0, %s5, %s3
  $region1: #{tpu_custom_call.1} parent=0
    #allocation2 [shape = 'u8[512]{0}', space=smem, size = 0x200, scoped, tag = 'input window, operand 0, single buffered']
    #allocation3 [shape = 's32[2]{0}', space=sflag, size = 0x8, scoped, tag = 'scoped memory for tpu_custom_call.1']
    #allocation4 [shape = 's32[2]{0}', space=sflag, size = 0x8, scoped, tag = 'scoped memory for tpu_custom_call.1']
    #allocation5 [shape = 's32[2]{0}', space=sflag, size = 0x8, scoped, tag = 'scoped memory for tpu_custom_call.1']
    #allocation6 [shape = 'u8[8192]{0}', space=vmem, size = 0x2000, scoped, tag = 'input window, operand 1']
    #allocation7 [shape = 'u8[8192]{0}', space=vmem, size = 0x2000, scoped, tag = 'output window, operand 0']
    %7 = vsyncpa [#allocation5], 0
    %8 = vsyncpa [#allocation3], 0
    %s9 = scalar_lea.sflag [#allocation3], 1
    %10 = vsyncpa %s9, 0
    %11 = vsyncpa [#allocation4], 0
    %s12 = scalar_lea.sflag [#allocation4], 1
    %13 = vsyncpa %s12, 0
    loop: start=0, step=1, limit=4
    $region2: #{tpu_custom_call.1} parent=1 // loop_pre_header
      _
    $region3: #{tpu_custom_call.1} parent=1 // loop_header
      %s15 = sphi 0, %s19
      %p16 = scmp.ge.s32.totalorder %s15, 4
      %s22 = sphi 0, %s34
      %s23 = sphi 0, %s30
      %s24 = sphi 0, %s22
      %s25 = sphi 0, %s23
      %s26 = sphi 0, %s24
      %s27 = sphi 0, %s25
      %s35 = sphi 0, %s35
      %s37 = sphi 0, %s35
      %s38 = sphi 0, %s37
      %s52 = sphi 0, %s38
      %s60 = sphi 0, %s62
      %s63 = sphi 0, %s60
      %s64 = sphi 0, %s63
      %s80 = sphi 0, %s64
      %s88 = sphi 0, %s90
      %s91 = sphi 0, %s88
      %s92 = sphi 0, %s91
      %s108 = sphi 0, %s92
    $region4: #{tpu_custom_call.1} parent=1 // loop_header_branch
      %18 = sbr.rel (%p16) target = $region8
    $region5: #{tpu_custom_call.1} parent=1 // loop_body
      %s20 = ssub.s32 %s15, 1
      %s21 = ssub.s32 %s15, 2
      %s28 = sadd.s32 1, %s23
      %p29 = scmp.ge.s32.totalorder %s28, 1
      %s30 = scalar_select %p29, 0, %s28
      %s31 = sadd.s32 1, %s22
      %s32 = scalar_select %p29, %s31, %s22
      %p33 = scmp.ge.s32.totalorder %s32, 2
      %s34 = scalar_select %p33, 0, %s32
      %s36 = sadd.s32 %s35, 1
      %p39 = scmp.eq.s32.totalorder %s15, 1
      %p40 = scmp.ne.s32.totalorder %s35, %s37
      %p41 = scmp.eq.s32.totalorder %s15, 0
      %p42 = por %p40, %p41
      %p43 = scmp.ne.s32.totalorder %s35, %s37
      %p44 = scmp.eq.s32.totalorder %s20, 1
      %p45 = por %p43, %p44
      %p46 = scmp.ne.s32.totalorder %s37, %s38
      %p47 = scmp.eq.s32.totalorder %s20, 0
      %p48 = por %p46, %p47
      %p49 = scmp.ne.s32.totalorder %s37, %s38
      %p50 = scmp.eq.s32.totalorder %s21, 1
      %p51 = por %p49, %p50
      %p53 = scmp.ne.s32.totalorder %s38, %s52
      %p54 = scmp.eq.s32.totalorder %s21, 0
      %p55 = por %p53, %p54
      %s56 = ssub.s32 %s22, %s34
      %s57 = ssub.s32 %s23, %s30
      %s58 = sor.u32 %s56, %s57
      %p59 = scmp.eq.s32.totalorder %s58, 0
      %s61 = sadd.s32 %s60, 1
      %s62 = scalar_select %p59, %s60, %s61
      %p65 = pneg %p59
      %p66 = scmp.eq.s32.totalorder %s15, 1
      %p67 = por %p65, %p66
      %p68 = scmp.ne.s32.totalorder %s60, %s63
      %p69 = scmp.eq.s32.totalorder %s15, 0
      %p70 = por %p68, %p69
      %p71 = scmp.ne.s32.totalorder %s60, %s63
      %p72 = scmp.eq.s32.totalorder %s20, 1
      %p73 = por %p71, %p72
      %p74 = scmp.ne.s32.totalorder %s63, %s64
      %p75 = scmp.eq.s32.totalorder %s20, 0
      %p76 = por %p74, %p75
      %p77 = scmp.ne.s32.totalorder %s63, %s64
      %p78 = scmp.eq.s32.totalorder %s21, 1
      %p79 = por %p77, %p78
      %p81 = scmp.ne.s32.totalorder %s64, %s80
      %p82 = scmp.eq.s32.totalorder %s21, 0
      %p83 = por %p81, %p82
      %s84 = ssub.s32 %s22, %s34
      %s85 = ssub.s32 %s23, %s30
      %s86 = sor.u32 %s84, %s85
      %p87 = scmp.eq.s32.totalorder %s86, 0
      %s89 = sadd.s32 %s88, 1
      %s90 = scalar_select %p87, %s88, %s89
      %p93 = pneg %p87
      %p94 = scmp.eq.s32.totalorder %s15, 1
      %p95 = por %p93, %p94
      %p96 = scmp.ne.s32.totalorder %s88, %s91
      %p97 = scmp.eq.s32.totalorder %s15, 0
      %p98 = por %p96, %p97
      %p99 = scmp.ne.s32.totalorder %s88, %s91
      %p100 = scmp.eq.s32.totalorder %s20, 1
      %p101 = por %p99, %p100
      %p102 = scmp.ne.s32.totalorder %s91, %s92
      %p103 = scmp.eq.s32.totalorder %s20, 0
      %p104 = por %p102, %p103
      %p105 = scmp.ne.s32.totalorder %s91, %s92
      %p106 = scmp.eq.s32.totalorder %s21, 1
      %p107 = por %p105, %p106
      %p109 = scmp.ne.s32.totalorder %s92, %s108
      %p110 = scmp.eq.s32.totalorder %s21, 0
      %p111 = por %p109, %p110
      %p112 = scmp.le.s32.totalorder 1, %s15
      %p113 = scmp.lt.s32.totalorder %s15, 3
      %p114 = pnand %p112, %p113
      %p115 = pneg %p114
      // Predicated region
      $region9: #{tpu_custom_call.1} parent=5 // pred_check
        _
      $region10: #{tpu_custom_call.1} parent=5 // pred_check_branch
        %117 = sbr.rel (%p114) target = $region12
      $region11: #{tpu_custom_call.1} parent=5 // pred_region
        %s118 = ssub.s32 %s15, 1
        // Predicated region
        $region13: #{tpu_custom_call.1} parent=11 // pred_check
          %p119 = pneg %p48
        $region14: #{tpu_custom_call.1} parent=11 // pred_check_branch
          %121 = sbr.rel (%p119) target = $region16
        $region15: #{tpu_custom_call.1} parent=11 // pred_region
          %123 = vsyncadd [#allocation5], 0
          %s125 = sshll.u32 %s0, 4
          %s126 = int_to_ptr.hbm [resolvable:$true] %s125
          %128 = dma.hbm_to_smem %s126, 16, [#allocation2], [#allocation5]
        $region16: #{tpu_custom_call.1} parent=11 // pred_fallthru
          _
      $region12: #{tpu_custom_call.1} parent=5 // pred_fallthru
        _
      %p129 = scmp.lt.s32.totalorder %s15, 2
      // Predicated region
      $region17: #{tpu_custom_call.1} parent=5 // pred_check
        %p130 = pneg %p129
      $region18: #{tpu_custom_call.1} parent=5 // pred_check_branch
        %132 = sbr.rel (%p130) target = $region20
      $region19: #{tpu_custom_call.1} parent=5 // pred_region
        // Predicated region
        $region21: #{tpu_custom_call.1} parent=19 // pred_check
          %p133 = pneg %p70
        $region22: #{tpu_custom_call.1} parent=19 // pred_check_branch
          %135 = sbr.rel (%p133) target = $region24
        $region23: #{tpu_custom_call.1} parent=19 // pred_region
          %s136 = sand.u32 %s60, 1
          %s137 = scalar_lea.sflag [#allocation3], %s136
          %s138 = sand.u32 %s60, 1
          %s139 = smul.addr %s138, 8
          %s140 = scalar_lea.vmem [#allocation6], %s139
          %142 = vsyncadd %s137, 0
          %s143 = sadd.s32 %s23, %s22
          %s144 = smul.addr %s143, 8
          %s145 = scalar_lea.hbm %s1, %s144
          %s147 = sshll.u32 %s145, 4
          %s148 = int_to_ptr.hbm [resolvable:$true] %s147
          %s149 = sshll.u32 %s140, 4
          %s150 = int_to_ptr.vmem [resolvable:$true] %s149
          %152 = dma.hbm_to_vmem [thread:$0]  %s148, 128, %s150, %s137
        $region24: #{tpu_custom_call.1} parent=19 // pred_fallthru
          _
      $region20: #{tpu_custom_call.1} parent=5 // pred_fallthru
        _
      %p153 = scmp.le.s32.totalorder 1, %s15
      %p154 = scmp.lt.s32.totalorder %s15, 3
      %p155 = pnand %p153, %p154
      %p156 = pneg %p155
      // Predicated region
      $region25: #{tpu_custom_call.1} parent=5 // pred_check
        _
      $region26: #{tpu_custom_call.1} parent=5 // pred_check_branch
        %158 = sbr.rel (%p155) target = $region28
      $region27: #{tpu_custom_call.1} parent=5 // pred_region
        %s159 = ssub.s32 %s15, 1
        // Predicated region
        $region29: #{tpu_custom_call.1} parent=27 // pred_check
          %p160 = pneg %p48
        $region30: #{tpu_custom_call.1} parent=27 // pred_check_branch
          %162 = sbr.rel (%p160) target = $region32
        $region31: #{tpu_custom_call.1} parent=27 // pred_region
          %164 = dma.done [#allocation5], 16
        $region32: #{tpu_custom_call.1} parent=27 // pred_fallthru
          _
        %s165 = sand.u32 %s63, 1
        %s166 = scalar_lea.sflag [#allocation3], %s165
        %s167 = sand.u32 %s63, 1
        %s168 = smul.addr %s167, 8
        %s169 = scalar_lea.vmem [#allocation6], %s168
        // Predicated region
        $region33: #{tpu_custom_call.1} parent=27 // pred_check
          %p170 = pneg %p76
        $region34: #{tpu_custom_call.1} parent=27 // pred_check_branch
          %172 = sbr.rel (%p170) target = $region36
        $region35: #{tpu_custom_call.1} parent=27 // pred_region
          %174 = dma.done %s166, 128
        $region36: #{tpu_custom_call.1} parent=27 // pred_fallthru
          _
        %175 = sfence
        %p176 = pneg %p48
        %p177 = pneg %p45
        %s178 = sand.u32 %s63, 1
        %s179 = scalar_lea.sflag [#allocation3], %s178
        %s180 = sand.u32 %s63, 1
        %s181 = smul.addr %s180, 8
        %s182 = scalar_lea.vmem [#allocation6], %s181
        %p183 = pneg %p76
        %p184 = pneg %p73
        %p185 = pneg %p104
        %p186 = pneg %p101
        %s187 = sand.u32 %s91, 1
        %s188 = scalar_lea.sflag [#allocation4], %s187
        %s189 = sand.u32 %s91, 1
        %s190 = smul.addr %s189, 8
        %s191 = scalar_lea.vmem [#allocation7], %s190
        %s192 = sld [smem:[#allocation2 + %s24]]
        %v193 = vld [vmem:[%s169] sm:$0xff]
        %v194 = vstv %s192
        %v195 = vmul.f32 %v193, %v194
        %196 = vst [vmem:[%s191] sm:$0xff] %v195
        %s197 = sand.u32 %s91, 1
        %s198 = scalar_lea.sflag [#allocation4], %s197
        %s199 = sand.u32 %s91, 1
        %s200 = smul.addr %s199, 8
        %s201 = scalar_lea.vmem [#allocation7], %s200
        // Predicated region
        $region37: #{tpu_custom_call.1} parent=27 // pred_check
          %p202 = pneg %p101
        $region38: #{tpu_custom_call.1} parent=27 // pred_check_branch
          %204 = sbr.rel (%p202) target = $region40
        $region39: #{tpu_custom_call.1} parent=27 // pred_region
          %206 = vsyncadd %s198, 0
          %s207 = sadd.s32 %s25, %s24
          %s208 = smul.addr %s207, 8
          %s209 = scalar_lea.hbm %s2, %s208
          %s211 = sshll.u32 %s201, 4
          %s212 = int_to_ptr.vmem [resolvable:$true] %s211
          %s213 = sshll.u32 %s209, 4
          %s214 = int_to_ptr.hbm [resolvable:$true] %s213
          %216 = dma.vmem_to_hbm [thread:$0]  %s212, 128, %s214, %s198
        $region40: #{tpu_custom_call.1} parent=27 // pred_fallthru
          _
      $region28: #{tpu_custom_call.1} parent=5 // pred_fallthru
        _
      %p217 = scmp.le.s32.totalorder 2, %s15
      // Predicated region
      $region41: #{tpu_custom_call.1} parent=5 // pred_check
        %p218 = pneg %p217
      $region42: #{tpu_custom_call.1} parent=5 // pred_check_branch
        %220 = sbr.rel (%p218) target = $region44
      $region43: #{tpu_custom_call.1} parent=5 // pred_region
        %s221 = ssub.s32 %s15, 2
        // Predicated region
        $region45: #{tpu_custom_call.1} parent=43 // pred_check
          %p222 = pneg %p107
        $region46: #{tpu_custom_call.1} parent=43 // pred_check_branch
          %224 = sbr.rel (%p222) target = $region48
        $region47: #{tpu_custom_call.1} parent=43 // pred_region
          %s225 = sand.u32 %s92, 1
          %s226 = scalar_lea.sflag [#allocation4], %s225
          %s227 = sand.u32 %s92, 1
          %s228 = smul.addr %s227, 8
          %s229 = scalar_lea.vmem [#allocation7], %s228
          %231 = dma.done %s226, 128
        $region48: #{tpu_custom_call.1} parent=43 // pred_fallthru
          _
      $region44: #{tpu_custom_call.1} parent=5 // pred_fallthru
        _
    $region6: #{tpu_custom_call.1} parent=1 // loop_footer
      %s19 = sadd.s32 1, %s15
    $region7: #{tpu_custom_call.1} parent=1 // loop_footer_branch
      %14 = sbr.rel target = $region3
    $region8: #{tpu_custom_call.1} parent=1 // loop_exit
      _
    %232 = vsyncpa [#allocation3], 1
    %s233 = scalar_lea.sflag [#allocation3], 1
    %234 = vsyncpa %s233, 1
    %235 = vsyncpa [#allocation4], 1
    %s236 = scalar_lea.sflag [#allocation4], 1
    %237 = vsyncpa %s236, 1
    %238 = vsyncpa [#allocation5], 1
    %s239 = scalar_lea.sflag [#allocation5], 1
    %240 = vsyncpa %s239, 1

</llo_original>
